<compile_context>
chip_gen: v7x
topology: tpu7x:2x2x1
jax: 0.10.0
libtpu: 0.0.40
codegen_flags: <defaults>
</compile_context>

<pallas_src>
import functools

import jax
import jax.numpy as jnp
from jax.experimental import pallas as pl
from jax.experimental.pallas import tpu as pltpu


def _round_up(v, m):
    return ((v + m - 1) // m) * m


def _vmem_capacity_bytes():
    """Per-core VMEM capacity; conservative fallback if the query fails."""
    try:
        info = pltpu.get_tpu_info()
        for name in ("vmem_capacity_bytes", "vmem_bytes", "vmem_size_bytes"):
            v = getattr(info, name, None)
            if v:
                return int(v)
    except Exception:
        pass
    return 64 * 1024 * 1024  # v7x per-TensorCore VMEM; safe everywhere


# ----------------------------- kernels ---------------------------------------


def _resblock_kernel_shortcut(x_ref, w0_ref, b0_ref, w1_ref, b1_ref, ws_ref, o_ref):
    """relu -> fc0 -> relu -> fc1 plus Linear shortcut; all dots accumulate in f32."""
    x = x_ref[...]
    cdt = w0_ref.dtype
    xr = jnp.maximum(x, 0).astype(cdt)
    net = jnp.dot(xr, w0_ref[...], preferred_element_type=jnp.float32) + b0_ref[...]
    h = jnp.maximum(net, 0.0).astype(cdt)
    dx = jnp.dot(h, w1_ref[...], preferred_element_type=jnp.float32) + b1_ref[...]
    # NOTE: the shortcut matmul runs in the compute dtype (bf16 by default) for MXU
    # throughput; accumulation stays f32.
    x_s = jnp.dot(x.astype(cdt), ws_ref[...], preferred_element_type=jnp.float32)
    o_ref[...] = (x_s + dx).astype(o_ref.dtype)


def _resblock_kernel_identity(x_ref, w0_ref, b0_ref, w1_ref, b1_ref, o_ref):
    """size_in == size_out: identity shortcut uses the un-truncated streamed x."""
    x = x_ref[...]
    cdt = w0_ref.dtype
    xr = jnp.maximum(x, 0).astype(cdt)
    net = jnp.dot(xr, w0_ref[...], preferred_element_type=jnp.float32) + b0_ref[...]
    h = jnp.maximum(net, 0.0).astype(cdt)
    dx = jnp.dot(h, w1_ref[...], preferred_element_type=jnp.float32) + b1_ref[...]
    o_ref[...] = (x.astype(jnp.float32) + dx).astype(o_ref.dtype)


# ----------------------------- wrapper ----------------------------------------


@functools.partial(jax.jit, static_argnames=("block_b", "compute_dtype", "out_dtype"))
def resnet_block_fc(x, params, *, block_b=1024, compute_dtype=jnp.bfloat16, out_dtype=None):
    """ResnetBlockFC forward.

    x: (B, size_in), streamed in its native dtype (no wrapper-side copy).
    params: dict with 'w0' (in, h), 'b0' (1, h), 'w1' (h, out), 'b1' (1, out),
            optional 'ws' (in, out)  (weights stored transposed vs PyTorch).
    compute_dtype: matmul-operand dtype (default bf16); accumulation is f32.
    out_dtype: output dtype (default x.dtype). bf16 output halves writeback traffic.
    """
    B, size_in = x.shape
    size_h = params["w0"].shape[1]
    size_out = params["w1"].shape[1]
    has_shortcut = "ws" in params

    cdt = jnp.dtype(compute_dtype) if compute_dtype is not None else jnp.dtype(x.dtype)
    odt = jnp.dtype(out_dtype) if out_dtype is not None else jnp.dtype(x.dtype)
    x_item = jnp.dtype(x.dtype).itemsize
    c_item = cdt.itemsize
    o_item = odt.itemsize

    # --- VMEM accounting -------------------------------------------------------
    # Resident weights / f32 biases; 2x for pipeline double buffering.
    wbytes = 2 * (
        (size_in * size_h + size_h * size_out + (size_in * size_out if has_shortcut else 0)) * c_item
        + (size_h + size_out) * 4
    )

    def tile_bytes(tb):
        # double-buffered x / out tiles (streamed)
        io = 2 * tb * size_in * x_item + 2 * tb * size_out * o_item
        # in-kernel temporaries: cdt cast of x, f32 net, cdt h, f32 dx (+ x_s)
        tmp = tb * size_in * c_item + tb * size_h * (4 + c_item) + 2 * tb * size_out * 4
        return io + tmp

    vmem_cap = _vmem_capacity_bytes()
    budget = int(0.70 * vmem_cap)

    # --- batch tile selection ----------------------------------------------------
    sub = 8 if (x_item == 4 and o_item == 4) else 16  # sublane multiple (packed dtypes)
    if B <= sub:
        tb = B  # single full-dim block is always legal
    else:
        tb = min(block_b, B)
        tb = max(sub, (tb // sub) * sub)
        if tb >= 512:
            tb = (tb // 256) * 256  # MXU-friendly M
        # >= 2 grid steps so the "parallel" batch axis shards across v7x's 2 TCs.
        half = -(-B // 2)
        align2 = 256 if half >= 256 else sub
        tb = min(tb, _round_up(half, align2))
        # shrink until the resident weights + per-step working set fit the budget
        while tb > sub and wbytes + tile_bytes(tb) > budget:
            tb = max(sub, ((tb // 2) // sub) * sub)

    num_steps = -(-B // tb)

    # --- operands (only the tiny weights/biases are cast; x streams as-is) -------
    w0 = params["w0"].astype(cdt)
    b0 = params["b0"].astype(jnp.float32).reshape(1, size_h)
    w1 = params["w1"].astype(cdt)
    b1 = params["b1"].astype(jnp.float32).reshape(1, size_out)

    def resident(shape):
        return pl.BlockSpec(shape, lambda i: (0, 0))

    operands = [x, w0, b0, w1, b1]
    in_specs = [
        pl.BlockSpec((tb, size_in), lambda i: (i, 0)),
        resident((size_in, size_h)),
        resident((1, size_h)),
        resident((size_h, size_out)),
        resident((1, size_out)),
    ]
    if has_shortcut:
        operands.append(params["ws"].astype(cdt))
        in_specs.append(resident((size_in, size_out)))
        kernel = _resblock_kernel_shortcut
    else:
        kernel = _resblock_kernel_identity

    out_spec = pl.BlockSpec((tb, size_out), lambda i: (i, 0))

    # --- scheduler hints ----------------------------------------------------------
    flops = 2 * B * (size_in * size_h + size_h * size_out
                     + (size_in * size_out if has_shortcut else 0))
    bytes_accessed = B * size_in * x_item + B * size_out * o_item + wbytes // 2
    cost = pl.CostEstimate(flops=flops, transcendentals=0, bytes_accessed=bytes_accessed)

    need = wbytes + tile_bytes(tb)
    vmem_limit = int(min(max(2 * need, 32 * 1024 * 1024), int(0.85 * vmem_cap)))

    out = pl.pallas_call(
        kernel,
        out_shape=jax.ShapeDtypeStruct((B, size_out), odt),
        grid=(num_steps,),
        in_specs=in_specs,
        out_specs=out_spec,
        compiler_params=pltpu.CompilerParams(
            dimension_semantics=("parallel",),
            vmem_limit_bytes=vmem_limit,
        ),
        cost_estimate=cost,
    )(*operands)

    return out


# ----------------------------- init + reference -------------------------------


def init_params(key, size_in, size_out=None, size_h=None, dtype=jnp.float32):
    """Mirrors ResnetBlockFC.__init__ (kaiming fan_in for fc_0/shortcut, zeros for fc_1.weight)."""
    if size_out is None:
        size_out = size_in
    if size_h is None:
        size_h = min(size_in, size_out)
    k0, ks = jax.random.split(key)
    std0 = (2.0 / size_in) ** 0.5
    w0 = (jax.random.normal(k0, (size_h, size_in), dtype) * std0).T   # stored (in, h)
    b0 = jnp.zeros((1, size_h), dtype)
    w1 = jnp.zeros((size_h, size_out), dtype)                          # fc_1.weight zero-init
    b1 = jnp.zeros((1, size_out), dtype)
    params = {"w0": w0, "b0": b0, "w1": w1, "b1": b1}
    if size_in != size_out:
        ws = (jax.random.normal(ks, (size_out, size_in), dtype) * std0).T
        params["ws"] = ws
    return params


def resnet_block_fc_ref(x, params):
    relu = lambda v: jnp.maximum(v, 0.0)
    net = relu(x) @ params["w0"] + params["b0"]
    dx = relu(net) @ params["w1"] + params["b1"]
    x_s = x @ params["ws"] if "ws" in params else x
    return x_s + dx


# ----------------------------- demo / self-test --------------------------------


if __name__ == "__main__":
    key = jax.random.PRNGKey(0)
    kx, kp1, kp2, kw1, kb1, kx2 = jax.random.split(key, 6)

    # Small shapes consistent with the module.
    B, size_in, size_h, size_out = 16, 32, 32, 48
    x = jax.random.normal(kx, (B, size_in), jnp.float32)
    params = init_params(kp1, size_in, size_out, size_h)
    # Non-zero fc_1 weights/bias so the full datapath is exercised
    # (module init zeroes fc_1.weight, which would make dx trivially zero).
    params["w1"] = jax.random.normal(kw1, (size_h, size_out), jnp.float32) * (2.0 / size_h) ** 0.5
    params["b1"] = jax.random.normal(kb1, (1, size_out), jnp.float32) * 0.1

    ref = resnet_block_fc_ref(x, params)

    # Case 1: size_in != size_out (Linear shortcut), exact f32 compute path.
    out = jax.block_until_ready(resnet_block_fc(x, params, compute_dtype=jnp.float32))
    assert out.shape == (B, size_out) and out.dtype == x.dtype
    assert jnp.allclose(out, ref, atol=1e-5, rtol=1e-5)

    # Case 2: size_in == size_out (identity shortcut), f32.
    params2 = init_params(kp2, size_in)
    out2 = jax.block_until_ready(resnet_block_fc(x, params2, compute_dtype=jnp.float32))
    assert out2.shape == (B, size_in)
    assert jnp.allclose(out2, resnet_block_fc_ref(x, params2), atol=1e-5, rtol=1e-5)

    # Case 3: multi-tile batch with a partial last block (no batch padding, no x copy).
    B3 = 1000
    x3 = jax.random.normal(kx2, (B3, size_in), jnp.float32)
    out3 = jax.block_until_ready(resnet_block_fc(x3, params, block_b=256, compute_dtype=jnp.float32))
    assert out3.shape == (B3, size_out)
    assert jnp.allclose(out3, resnet_block_fc_ref(x3, params), atol=1e-5, rtol=1e-5)

    # Case 4: default bf16 compute path (f32 x streamed, cast in-kernel, f32 accumulation).
    out4 = jax.block_until_ready(resnet_block_fc(x, params))
    assert out4.shape == (B, size_out) and out4.dtype == x.dtype
    assert jnp.allclose(out4, ref, atol=0.25, rtol=0.1)

    # Case 5: full bf16 streaming (bf16 in, bf16 out) — halves HBM traffic.
    x_bf16 = x.astype(jnp.bfloat16)
    out5 = jax.block_until_ready(resnet_block_fc(x_bf16, params))
    assert out5.dtype == jnp.bfloat16
    ref5 = resnet_block_fc_ref(x_bf16.astype(jnp.float32), params)
    assert jnp.allclose(out5.astype(jnp.float32), ref5, atol=0.3, rtol=0.1)

    print("KERNEL_OK")
</pallas_src>

<mosaic_0001>
module attributes {stable_mosaic.version = 11 : i64} {
  func.func @_resblock_kernel_shortcut(%arg0: i32, %arg1: memref<8x32xf32, #tpu.memory_space<vmem>>, %arg2: memref<32x32xf32, #tpu.memory_space<vmem>>, %arg3: memref<1x32xf32, #tpu.memory_space<vmem>>, %arg4: memref<32x48xf32, #tpu.memory_space<vmem>>, %arg5: memref<1x48xf32, #tpu.memory_space<vmem>>, %arg6: memref<32x48xf32, #tpu.memory_space<vmem>>, %arg7: memref<8x48xf32, #tpu.memory_space<vmem>>) attributes {dimension_semantics = [#tpu.dimension_semantics<parallel>], iteration_bounds = array<i64: 2>, scalar_prefetch = 0 : i64, scratch_operands = 0 : i64, tpu.core_type = #tpu.core_type<tc>, window_params = [{transform_indices = @transform_0, window_bounds = array<i64: 8, 32>}, {pipeline_mode = #tpu.pipeline_mode<synchronous>, transform_indices = @transform_1, window_bounds = array<i64: 32, 32>}, {pipeline_mode = #tpu.pipeline_mode<synchronous>, transform_indices = @transform_2, window_bounds = array<i64: 1, 32>}, {pipeline_mode = #tpu.pipeline_mode<synchronous>, transform_indices = @transform_3, window_bounds = array<i64: 32, 48>}, {pipeline_mode = #tpu.pipeline_mode<synchronous>, transform_indices = @transform_4, window_bounds = array<i64: 1, 48>}, {pipeline_mode = #tpu.pipeline_mode<synchronous>, transform_indices = @transform_5, window_bounds = array<i64: 32, 48>}, {transform_indices = @transform_6, window_bounds = array<i64: 8, 48>}]} {
    %c0 = arith.constant 0 : index
    %c0_0 = arith.constant 0 : index
    %0 = vector.load %arg1[%c0, %c0_0] : memref<8x32xf32, #tpu.memory_space<vmem>>, vector<8x32xf32>
    %cst = arith.constant 0.000000e+00 : f32
    %1 = vector.broadcast %cst : f32 to vector<8x32xf32>
    %2 = arith.maximumf %0, %1 : vector<8x32xf32>
    %c0_1 = arith.constant 0 : index
    %c0_2 = arith.constant 0 : index
    %3 = vector.load %arg2[%c0_1, %c0_2] : memref<32x32xf32, #tpu.memory_space<vmem>>, vector<32x32xf32>
    %cst_3 = arith.constant dense<0.000000e+00> : vector<8x32xf32>
    %4 = tpu.matmul %2, %3, %cst_3 {dimension_numbers = #tpu.dot_dimension_numbers<[1], [0], [0], [1], [0, 0, 1, 1], [], []>} : vector<8x32xf32>, vector<32x32xf32>, vector<8x32xf32> -> vector<8x32xf32>
    %c0_4 = arith.constant 0 : index
    %c0_5 = arith.constant 0 : index
    %5 = vector.load %arg3[%c0_4, %c0_5] : memref<1x32xf32, #tpu.memory_space<vmem>>, vector<1x32xf32>
    %6 = vector.broadcast %5 : vector<1x32xf32> to vector<8x32xf32>
    %7 = arith.addf %4, %6 : vector<8x32xf32>
    %cst_6 = arith.constant 0.000000e+00 : f32
    %8 = vector.broadcast %cst_6 : f32 to vector<8x32xf32>
    %9 = arith.maximumf %7, %8 : vector<8x32xf32>
    %c0_7 = arith.constant 0 : index
    %c0_8 = arith.constant 0 : index
    %10 = vector.load %arg4[%c0_7, %c0_8] : memref<32x48xf32, #tpu.memory_space<vmem>>, vector<32x48xf32>
    %cst_9 = arith.constant dense<0.000000e+00> : vector<8x48xf32>
    %11 = tpu.matmul %9, %10, %cst_9 {dimension_numbers = #tpu.dot_dimension_numbers<[1], [0], [0], [1], [0, 0, 1, 1], [], []>} : vector<8x32xf32>, vector<32x48xf32>, vector<8x48xf32> -> vector<8x48xf32>
    %c0_10 = arith.constant 0 : index
    %c0_11 = arith.constant 0 : index
    %12 = vector.load %arg5[%c0_10, %c0_11] : memref<1x48xf32, #tpu.memory_space<vmem>>, vector<1x48xf32>
    %13 = vector.broadcast %12 : vector<1x48xf32> to vector<8x48xf32>
    %14 = arith.addf %11, %13 : vector<8x48xf32>
    %c0_12 = arith.constant 0 : index
    %c0_13 = arith.constant 0 : index
    %15 = vector.load %arg6[%c0_12, %c0_13] : memref<32x48xf32, #tpu.memory_space<vmem>>, vector<32x48xf32>
    %cst_14 = arith.constant dense<0.000000e+00> : vector<8x48xf32>
    %16 = tpu.matmul %0, %15, %cst_14 {dimension_numbers = #tpu.dot_dimension_numbers<[1], [0], [0], [1], [0, 0, 1, 1], [], []>} : vector<8x32xf32>, vector<32x48xf32>, vector<8x48xf32> -> vector<8x48xf32>
    %17 = arith.addf %16, %14 : vector<8x48xf32>
    %c0_15 = arith.constant 0 : index
    %c0_16 = arith.constant 0 : index
    %18 = vector.load %arg7[%c0_15, %c0_16] : memref<8x48xf32, #tpu.memory_space<vmem>>, vector<8x48xf32>
    tpu.vector_store %arg7[%c0_15, %c0_16], %17 {strides = array<i32>} : memref<8x48xf32, #tpu.memory_space<vmem>>, vector<8x48xf32>,
    return
  }
  func.func @transform_0(%arg0: i32) -> (i32, i32) {
    %c0_i32 = arith.constant 0 : i32
    %c0_i32_0 = arith.constant 0 : i32
    return %arg0, %c0_i32 : i32, i32
  }
  func.func @transform_1(%arg0: i32) -> (i32, i32) {
    %c0_i32 = arith.constant 0 : i32
    %c0_i32_0 = arith.constant 0 : i32
    %c0_i32_1 = arith.constant 0 : i32
    return %c0_i32, %c0_i32_0 : i32, i32
  }
  func.func @transform_2(%arg0: i32) -> (i32, i32) {
    %c0_i32 = arith.constant 0 : i32
    %c0_i32_0 = arith.constant 0 : i32
    %c0_i32_1 = arith.constant 0 : i32
    return %c0_i32, %c0_i32_0 : i32, i32
  }
  func.func @transform_3(%arg0: i32) -> (i32, i32) {
    %c0_i32 = arith.constant 0 : i32
    %c0_i32_0 = arith.constant 0 : i32
    %c0_i32_1 = arith.constant 0 : i32
    return %c0_i32, %c0_i32_0 : i32, i32
  }
  func.func @transform_4(%arg0: i32) -> (i32, i32) {
    %c0_i32 = arith.constant 0 : i32
    %c0_i32_0 = arith.constant 0 : i32
    %c0_i32_1 = arith.constant 0 : i32
    return %c0_i32, %c0_i32_0 : i32, i32
  }
  func.func @transform_5(%arg0: i32) -> (i32, i32) {
    %c0_i32 = arith.constant 0 : i32
    %c0_i32_0 = arith.constant 0 : i32
    %c0_i32_1 = arith.constant 0 : i32
    return %c0_i32, %c0_i32_0 : i32, i32
  }
  func.func @transform_6(%arg0: i32) -> (i32, i32) {
    %c0_i32 = arith.constant 0 : i32
    %c0_i32_0 = arith.constant 0 : i32
    return %arg0, %c0_i32 : i32, i32
  }
}

</mosaic_0001>

<llo_original>
// kernel: resnet_block_fc.1
$region0: #{resnet_block_fc.1}
  #allocation0 [shape = 'u32[]', space=smem, size = 0x4, offset = 0x4, fixed_abs, tag = 'smem constant byte address 0x4 - core index']
  #allocation1 [shape = 'u32[144,128]{1,0:T(1,128)}', space=vmem, size = 0x12000, scoped, tag = 'internal scratch']
  %s0 = inlined_call_operand.hbm [shape: f32[16,32], index: 0, kind: input, shape index: {}]
  %s1 = inlined_call_operand.hbm [shape: f32[32,32], index: 1, kind: input, shape index: {}]
  %s2 = inlined_call_operand.vmem [shape: f32[1,32], index: 2, kind: input, shape index: {}]
  %s3 = inlined_call_operand.hbm [shape: f32[32,48], index: 3, kind: input, shape index: {}]
  %s4 = inlined_call_operand.vmem [shape: f32[1,48], index: 4, kind: input, shape index: {}]
  %s5 = inlined_call_operand.hbm [shape: f32[32,48], index: 5, kind: input, shape index: {}]
  %s6 = inlined_call_operand.hbm [shape: f32[16,48], index: 6, kind: output, shape index: {}]
  %s7 = sld [smem:[#allocation0]]
  $region73: #{resnet_block_fc.1} parent=0
    _
  %s9 = ssub.s32 1, %s7
  %s10 = scalar_select 0, %s9, %s7
  $region1: #{resnet_block_fc.1} parent=0
    #allocation2 [shape = 'u8[8192]{0}', space=vmem, size = 0x2000, scoped, tag = 'input window, operand 0']
    #allocation3 [shape = 's32[2]{0}', space=sflag, size = 0x8, scoped, tag = 'scoped memory for resnet_block_fc.1']
    #allocation4 [shape = 's32[2]{0}', space=sflag, size = 0x8, scoped, tag = 'scoped memory for resnet_block_fc.1']
    #allocation5 [shape = 'u8[16384]{0}', space=vmem, size = 0x4000, scoped, tag = 'input window, operand 1, single buffered']
    #allocation6 [shape = 's32[1]{0}', space=sflag, size = 0x4, scoped, tag = 'scoped memory for resnet_block_fc.1']
    #allocation7 [shape = 'u8[16384]{0}', space=vmem, size = 0x4000, scoped, tag = 'input window, operand 3, single buffered']
    #allocation8 [shape = 'u8[16384]{0}', space=vmem, size = 0x4000, scoped, tag = 'input window, operand 5, single buffered']
    #allocation9 [shape = 's32[1]{0}', space=sflag, size = 0x4, scoped, tag = 'scoped memory for resnet_block_fc.1']
    #allocation10 [shape = 'u8[8192]{0}', space=vmem, size = 0x2000, scoped, tag = 'output window, operand 0']
    %11 = vsyncpa [#allocation3], 0
    %s12 = scalar_lea.sflag [#allocation3], 1
    %13 = vsyncpa %s12, 0
    %14 = vsyncpa [#allocation6], 0
    %15 = vsyncpa [#allocation9], 0
    %16 = vsyncpa [#allocation4], 0
    %s17 = scalar_lea.sflag [#allocation4], 1
    %18 = vsyncpa %s17, 0
    loop: start=0, step=1, limit=4
    $region2: #{resnet_block_fc.1} parent=1 // loop_pre_header
      _
    $region3: #{resnet_block_fc.1} parent=1 // loop_header
      %s20 = sphi 0, %s24
      %p21 = scmp.ge.s32.totalorder %s20, 4
      %s30 = sphi 0, %s32
      %s33 = sphi 0, %s30
      %s34 = sphi 0, %s33
      %s50 = sphi 0, %s34
      %s54 = sphi 0, %s54
      %s56 = sphi 0, %s54
      %s57 = sphi 0, %s56
      %s71 = sphi 0, %s57
      %s75 = sphi 0, %s75
      %s77 = sphi 0, %s75
      %s78 = sphi 0, %s77
      %s92 = sphi 0, %s78
      %s96 = sphi 0, %s96
      %s98 = sphi 0, %s96
      %s99 = sphi 0, %s98
      %s113 = sphi 0, %s99
      %s117 = sphi 0, %s117
      %s119 = sphi 0, %s117
      %s120 = sphi 0, %s119
      %s134 = sphi 0, %s120
      %s138 = sphi 0, %s138
      %s140 = sphi 0, %s138
      %s141 = sphi 0, %s140
      %s155 = sphi 0, %s141
      %s161 = sphi 0, %s163
      %s164 = sphi 0, %s161
      %s165 = sphi 0, %s164
      %s181 = sphi 0, %s165
    $region4: #{resnet_block_fc.1} parent=1 // loop_header_branch
      %23 = sbr.rel (%p21) target = $region8
    $region5: #{resnet_block_fc.1} parent=1 // loop_body
      %s25 = ssub.s32 %s20, 1
      %s26 = ssub.s32 %s20, 2
      %s27 = sadd.s32 %s20, 1
      %s28 = ssub.s32 %s20, %s27
      %p29 = scmp.eq.s32.totalorder %s28, 0
      %s31 = sadd.s32 %s30, 1
      %s32 = scalar_select %p29, %s30, %s31
      %p35 = pneg %p29
      %p36 = scmp.eq.s32.totalorder %s20, 1
      %p37 = por %p35, %p36
      %p38 = scmp.ne.s32.totalorder %s30, %s33
      %p39 = scmp.eq.s32.totalorder %s20, 0
      %p40 = por %p38, %p39
      %p41 = scmp.ne.s32.totalorder %s30, %s33
      %p42 = scmp.eq.s32.totalorder %s25, 1
      %p43 = por %p41, %p42
      %p44 = scmp.ne.s32.totalorder %s33, %s34
      %p45 = scmp.eq.s32.totalorder %s25, 0
      %p46 = por %p44, %p45
      %p47 = scmp.ne.s32.totalorder %s33, %s34
      %p48 = scmp.eq.s32.totalorder %s26, 1
      %p49 = por %p47, %p48
      %p51 = scmp.ne.s32.totalorder %s34, %s50
      %p52 = scmp.eq.s32.totalorder %s26, 0
      %p53 = por %p51, %p52
      %s55 = sadd.s32 %s54, 1
      %p58 = scmp.eq.s32.totalorder %s20, 1
      %p59 = scmp.ne.s32.totalorder %s54, %s56
      %p60 = scmp.eq.s32.totalorder %s20, 0
      %p61 = por %p59, %p60
      %p62 = scmp.ne.s32.totalorder %s54, %s56
      %p63 = scmp.eq.s32.totalorder %s25, 1
      %p64 = por %p62, %p63
      %p65 = scmp.ne.s32.totalorder %s56, %s57
      %p66 = scmp.eq.s32.totalorder %s25, 0
      %p67 = por %p65, %p66
      %p68 = scmp.ne.s32.totalorder %s56, %s57
      %p69 = scmp.eq.s32.totalorder %s26, 1
      %p70 = por %p68, %p69
      %p72 = scmp.ne.s32.totalorder %s57, %s71
      %p73 = scmp.eq.s32.totalorder %s26, 0
      %p74 = por %p72, %p73
      %s76 = sadd.s32 %s75, 1
      %p79 = scmp.eq.s32.totalorder %s20, 1
      %p80 = scmp.ne.s32.totalorder %s75, %s77
      %p81 = scmp.eq.s32.totalorder %s20, 0
      %p82 = por %p80, %p81
      %p83 = scmp.ne.s32.totalorder %s75, %s77
      %p84 = scmp.eq.s32.totalorder %s25, 1
      %p85 = por %p83, %p84
      %p86 = scmp.ne.s32.totalorder %s77, %s78
      %p87 = scmp.eq.s32.totalorder %s25, 0
      %p88 = por %p86, %p87
      %p89 = scmp.ne.s32.totalorder %s77, %s78
      %p90 = scmp.eq.s32.totalorder %s26, 1
      %p91 = por %p89, %p90
      %p93 = scmp.ne.s32.totalorder %s78, %s92
      %p94 = scmp.eq.s32.totalorder %s26, 0
      %p95 = por %p93, %p94
      %s97 = sadd.s32 %s96, 1
      %p100 = scmp.eq.s32.totalorder %s20, 1
      %p101 = scmp.ne.s32.totalorder %s96, %s98
      %p102 = scmp.eq.s32.totalorder %s20, 0
      %p103 = por %p101, %p102
      %p104 = scmp.ne.s32.totalorder %s96, %s98
      %p105 = scmp.eq.s32.totalorder %s25, 1
      %p106 = por %p104, %p105
      %p107 = scmp.ne.s32.totalorder %s98, %s99
      %p108 = scmp.eq.s32.totalorder %s25, 0
      %p109 = por %p107, %p108
      %p110 = scmp.ne.s32.totalorder %s98, %s99
      %p111 = scmp.eq.s32.totalorder %s26, 1
      %p112 = por %p110, %p111
      %p114 = scmp.ne.s32.totalorder %s99, %s113
      %p115 = scmp.eq.s32.totalorder %s26, 0
      %p116 = por %p114, %p115
      %s118 = sadd.s32 %s117, 1
      %p121 = scmp.eq.s32.totalorder %s20, 1
      %p122 = scmp.ne.s32.totalorder %s117, %s119
      %p123 = scmp.eq.s32.totalorder %s20, 0
      %p124 = por %p122, %p123
      %p125 = scmp.ne.s32.totalorder %s117, %s119
      %p126 = scmp.eq.s32.totalorder %s25, 1
      %p127 = por %p125, %p126
      %p128 = scmp.ne.s32.totalorder %s119, %s120
      %p129 = scmp.eq.s32.totalorder %s25, 0
      %p130 = por %p128, %p129
      %p131 = scmp.ne.s32.totalorder %s119, %s120
      %p132 = scmp.eq.s32.totalorder %s26, 1
      %p133 = por %p131, %p132
      %p135 = scmp.ne.s32.totalorder %s120, %s134
      %p136 = scmp.eq.s32.totalorder %s26, 0
      %p137 = por %p135, %p136
      %s139 = sadd.s32 %s138, 1
      %p142 = scmp.eq.s32.totalorder %s20, 1
      %p143 = scmp.ne.s32.totalorder %s138, %s140
      %p144 = scmp.eq.s32.totalorder %s20, 0
      %p145 = por %p143, %p144
      %p146 = scmp.ne.s32.totalorder %s138, %s140
      %p147 = scmp.eq.s32.totalorder %s25, 1
      %p148 = por %p146, %p147
      %p149 = scmp.ne.s32.totalorder %s140, %s141
      %p150 = scmp.eq.s32.totalorder %s25, 0
      %p151 = por %p149, %p150
      %p152 = scmp.ne.s32.totalorder %s140, %s141
      %p153 = scmp.eq.s32.totalorder %s26, 1
      %p154 = por %p152, %p153
      %p156 = scmp.ne.s32.totalorder %s141, %s155
      %p157 = scmp.eq.s32.totalorder %s26, 0
      %p158 = por %p156, %p157
      %s159 = ssub.s32 %s20, %s27
      %p160 = scmp.eq.s32.totalorder %s159, 0
      %s162 = sadd.s32 %s161, 1
      %s163 = scalar_select %p160, %s161, %s162
      %p166 = pneg %p160
      %p167 = scmp.eq.s32.totalorder %s20, 1
      %p168 = por %p166, %p167
      %p169 = scmp.ne.s32.totalorder %s161, %s164
      %p170 = scmp.eq.s32.totalorder %s20, 0
      %p171 = por %p169, %p170
      %p172 = scmp.ne.s32.totalorder %s161, %s164
      %p173 = scmp.eq.s32.totalorder %s25, 1
      %p174 = por %p172, %p173
      %p175 = scmp.ne.s32.totalorder %s164, %s165
      %p176 = scmp.eq.s32.totalorder %s25, 0
      %p177 = por %p175, %p176
      %p178 = scmp.ne.s32.totalorder %s164, %s165
      %p179 = scmp.eq.s32.totalorder %s26, 1
      %p180 = por %p178, %p179
      %p182 = scmp.ne.s32.totalorder %s165, %s181
      %p183 = scmp.eq.s32.totalorder %s26, 0
      %p184 = por %p182, %p183
      %p185 = scmp.le.s32.totalorder 1, %s20
      %p186 = scmp.lt.s32.totalorder %s20, 3
      %p187 = pnand %p185, %p186
      %p188 = pneg %p187
      // Predicated region
      $region9: #{resnet_block_fc.1} parent=5 // pred_check
        _
      $region10: #{resnet_block_fc.1} parent=5 // pred_check_branch
        %190 = sbr.rel (%p187) target = $region12
      $region11: #{resnet_block_fc.1} parent=5 // pred_region
        %s191 = ssub.s32 %s20, 1
        // Predicated region
        $region13: #{resnet_block_fc.1} parent=11 // pred_check
          %p192 = pneg %p67
        $region14: #{resnet_block_fc.1} parent=11 // pred_check_branch
          %194 = sbr.rel (%p192) target = $region16
        $region15: #{resnet_block_fc.1} parent=11 // pred_region
          %s196 = ssub.s32 512, 512
          %197 = vsyncadd [#allocation6], %s196
          %s198 = sshll.u32 [#allocation5], 4
          %s199 = int_to_ptr.vmem [resolvable:$true] %s198
          %204 = dma.hbm_to_vmem [thread:$0]  %s1, 512, %s199, [#allocation6], 128, 128, 8
        $region16: #{resnet_block_fc.1} parent=11 // pred_fallthru
          _
        // Predicated region
        $region17: #{resnet_block_fc.1} parent=11 // pred_check
          %p205 = pneg %p88
        $region18: #{resnet_block_fc.1} parent=11 // pred_check_branch
          %207 = sbr.rel (%p205) target = $region20
        $region19: #{resnet_block_fc.1} parent=11 // pred_region
          _
        $region20: #{resnet_block_fc.1} parent=11 // pred_fallthru
          _
        // Predicated region
        $region21: #{resnet_block_fc.1} parent=11 // pred_check
          %p208 = pneg %p109
        $region22: #{resnet_block_fc.1} parent=11 // pred_check_branch
          %210 = sbr.rel (%p208) target = $region24
        $region23: #{resnet_block_fc.1} parent=11 // pred_region
          %s212 = ssub.s32 512, 512
          %213 = vsyncadd [#allocation6], %s212
          %s214 = sshll.u32 [#allocation7], 4
          %s215 = int_to_ptr.vmem [resolvable:$true] %s214
          %220 = dma.hbm_to_vmem [thread:$0]  %s3, 512, %s215, [#allocation6], 128, 128, 8
        $region24: #{resnet_block_fc.1} parent=11 // pred_fallthru
          _
        // Predicated region
        $region25: #{resnet_block_fc.1} parent=11 // pred_check
          %p221 = pneg %p130
        $region26: #{resnet_block_fc.1} parent=11 // pred_check_branch
          %223 = sbr.rel (%p221) target = $region28
        $region27: #{resnet_block_fc.1} parent=11 // pred_region
          _
        $region28: #{resnet_block_fc.1} parent=11 // pred_fallthru
          _
        // Predicated region
        $region29: #{resnet_block_fc.1} parent=11 // pred_check
          %p224 = pneg %p151
        $region30: #{resnet_block_fc.1} parent=11 // pred_check_branch
          %226 = sbr.rel (%p224) target = $region32
        $region31: #{resnet_block_fc.1} parent=11 // pred_region
          %s228 = ssub.s32 512, 512
          %229 = vsyncadd [#allocation9], %s228
          %s230 = sshll.u32 [#allocation8], 4
          %s231 = int_to_ptr.vmem [resolvable:$true] %s230
          %236 = dma.hbm_to_vmem [thread:$0]  %s5, 512, %s231, [#allocation9], 128, 128, 8
        $region32: #{resnet_block_fc.1} parent=11 // pred_fallthru
          _
      $region12: #{resnet_block_fc.1} parent=5 // pred_fallthru
        _
      %p237 = scmp.lt.s32.totalorder %s20, 2
      // Predicated region
      $region33: #{resnet_block_fc.1} parent=5 // pred_check
        %p238 = pneg %p237
      $region34: #{resnet_block_fc.1} parent=5 // pred_check_branch
        %240 = sbr.rel (%p238) target = $region36
      $region35: #{resnet_block_fc.1} parent=5 // pred_region
        // Predicated region
        $region37: #{resnet_block_fc.1} parent=35 // pred_check
          %p241 = pneg %p40
        $region38: #{resnet_block_fc.1} parent=35 // pred_check_branch
          %243 = sbr.rel (%p241) target = $region40
        $region39: #{resnet_block_fc.1} parent=35 // pred_region
          %s244 = sand.u32 %s30, 1
          %s245 = scalar_lea.sflag [#allocation3], %s244
          %s246 = sand.u32 %s30, 1
          %s247 = smul.addr %s246, 8
          %s248 = scalar_lea.vmem [#allocation2], %s247
          %s250 = ssub.s32 128, 128
          %251 = vsyncadd %s245, %s250
          %s252 = smul.addr %s20, 128
          %s253 = scalar_lea.hbm %s0, %s252
          %s255 = sshll.u32 %s248, 4
          %s256 = int_to_ptr.vmem [resolvable:$true] %s255
          %258 = dma.hbm_to_vmem [thread:$0]  %s253, 128, %s256, %s245
        $region40: #{resnet_block_fc.1} parent=35 // pred_fallthru
          _
      $region36: #{resnet_block_fc.1} parent=5 // pred_fallthru
        _
      %p259 = scmp.le.s32.totalorder 1, %s20
      %p260 = scmp.lt.s32.totalorder %s20, 3
      %p261 = pnand %p259, %p260
      %p262 = pneg %p261
      // Predicated region
      $region41: #{resnet_block_fc.1} parent=5 // pred_check
        _
      $region42: #{resnet_block_fc.1} parent=5 // pred_check_branch
        %264 = sbr.rel (%p261) target = $region44
      $region43: #{resnet_block_fc.1} parent=5 // pred_region
        %s265 = ssub.s32 %s20, 1
        %s266 = sand.u32 %s33, 1
        %s267 = scalar_lea.sflag [#allocation3], %s266
        %s268 = sand.u32 %s33, 1
        %s269 = smul.addr %s268, 8
        %s270 = scalar_lea.vmem [#allocation2], %s269
        // Predicated region
        $region45: #{resnet_block_fc.1} parent=43 // pred_check
          %p271 = pneg %p46
        $region46: #{resnet_block_fc.1} parent=43 // pred_check_branch
          %273 = sbr.rel (%p271) target = $region48
        $region47: #{resnet_block_fc.1} parent=43 // pred_region
          %274 = dma.done %s267, 128
        $region48: #{resnet_block_fc.1} parent=43 // pred_fallthru
          _
        // Predicated region
        $region49: #{resnet_block_fc.1} parent=43 // pred_check
          %p275 = pneg %p67
        $region50: #{resnet_block_fc.1} parent=43 // pred_check_branch
          %277 = sbr.rel (%p275) target = $region52
        $region51: #{resnet_block_fc.1} parent=43 // pred_region
          %278 = dma.done [#allocation6], 512
        $region52: #{resnet_block_fc.1} parent=43 // pred_fallthru
          _
        // Predicated region
        $region53: #{resnet_block_fc.1} parent=43 // pred_check
          %p279 = pneg %p109
        $region54: #{resnet_block_fc.1} parent=43 // pred_check_branch
          %281 = sbr.rel (%p279) target = $region56
        $region55: #{resnet_block_fc.1} parent=43 // pred_region
          %282 = dma.done [#allocation6], 512
        $region56: #{resnet_block_fc.1} parent=43 // pred_fallthru
          _
        // Predicated region
        $region57: #{resnet_block_fc.1} parent=43 // pred_check
          %p283 = pneg %p151
        $region58: #{resnet_block_fc.1} parent=43 // pred_check_branch
          %285 = sbr.rel (%p283) target = $region60
        $region59: #{resnet_block_fc.1} parent=43 // pred_region
          %286 = dma.done [#allocation9], 512
        $region60: #{resnet_block_fc.1} parent=43 // pred_fallthru
          _
        %s287 = sand.u32 %s33, 1
        %s288 = scalar_lea.sflag [#allocation3], %s287
        %s289 = sand.u32 %s33, 1
        %s290 = smul.addr %s289, 8
        %s291 = scalar_lea.vmem [#allocation2], %s290
        %p292 = pneg %p46
        %p293 = pneg %p43
        %p294 = pneg %p67
        %p295 = pneg %p64
        %p296 = pneg %p88
        %p297 = pneg %p85
        %p298 = pneg %p109
        %p299 = pneg %p106
        %p300 = pneg %p130
        %p301 = pneg %p127
        %p302 = pneg %p151
        %p303 = pneg %p148
        %p304 = pneg %p177
        %p305 = pneg %p174
        %s306 = sand.u32 %s164, 1
        %s307 = scalar_lea.sflag [#allocation4], %s306
        %s308 = sand.u32 %s164, 1
        %s309 = smul.addr %s308, 8
        %s310 = scalar_lea.vmem [#allocation10], %s309
        %v311 = vld [vmem:[%s270] sm:$0xff]
        %v312 = vmax.f32 %v311, 0.0
        %v313 = vld [vmem:[#allocation5] sm:$0xff]
        %v314 = vld [vmem:[#allocation5 + $0x8] sm:$0xff]
        %v315 = vld [vmem:[#allocation5 + $0x10] sm:$0xff]
        %v316 = vld [vmem:[#allocation5 + $0x18] sm:$0xff]
        %v317 = vld [vmem:[%s2] sm:$0x1]
        %v319 = vlaneseq
        %v320 = vshrl.u32 %v319, 7
        %v321 = vsub.s32 0, %v320
        %v322 = vrot.slane %v317, %v321
        %vm324 = vcmask 261120
        %v326 = vsel %vm324, %v312, 0
        %328 = vmatprep.subr.mxu0 0.0
        %329 = vmatpush1.msra.mxu0 %v313
        %330 = vmatprep.subr.mxu0 0.0
        %331 = vmatpush1.msra.mxu0 %v314
        %332 = vmatprep.subr.mxu0 0.0
        %333 = vmatpush1.msra.mxu0 %v315
        %334 = vmatprep.subr.mxu0 0.0
        %335 = vmatpush1.msra.mxu0 %v316
        %336 = vmatprep.subr.mxu0 0.0
        %337 = vmatpush1.msra.mxu0 0.0
        %338 = vmatprep.subr.mxu0 0.0
        %339 = vmatpush1.msra.mxu0 0.0
        %340 = vmatprep.subr.mxu0 0.0
        %341 = vmatpush1.msra.mxu0 0.0
        %342 = vmatprep.subr.mxu0 0.0
        %343 = vmatpush1.msra.mxu0 0.0
        %344 = vmatprep.subr.mxu0 0.0
        %345 = vmatpush1.msra.mxu0 0.0
        %346 = vmatprep.subr.mxu0 0.0
        %347 = vmatpush1.msra.mxu0 0.0
        %348 = vmatprep.subr.mxu0 0.0
        %349 = vmatpush1.msra.mxu0 0.0
        %350 = vmatprep.subr.mxu0 0.0
        %351 = vmatpush1.msra.mxu0 0.0
        %352 = vmatprep.subr.mxu0 0.0
        %353 = vmatpush1.msra.mxu0 0.0
        %354 = vmatprep.subr.mxu0 0.0
        %355 = vmatpush1.msra.mxu0 0.0
        %356 = vmatprep.subr.mxu0 0.0
        %357 = vmatpush1.msra.mxu0 0.0
        %358 = vmatprep.subr.mxu0 0.0
        %359 = vmatpush1.msra.mxu0 0.0
        %360 = vmatprep.subr.mxu0 0.0
        %361 = vmatpush1.msra.mxu0 0.0
        %362 = vmatprep.subr.mxu0 0.0
        %363 = vmatpush1.msra.mxu0 0.0
        %364 = vmatprep.subr.mxu0 0.0
        %365 = vmatpush1.msra.mxu0 0.0
        %366 = vmatprep.subr.mxu0 0.0
        %367 = vmatpush1.msra.mxu0 0.0
        %368 = vmatprep.subr.mxu0 0.0
        %369 = vmatpush1.msra.mxu0 0.0
        %370 = vmatprep.subr.mxu0 0.0
        %371 = vmatpush1.msra.mxu0 0.0
        %372 = vmatprep.subr.mxu0 0.0
        %373 = vmatpush1.msra.mxu0 0.0
        %374 = vmatprep.subr.mxu0 0.0
        %375 = vmatpush1.msra.mxu0 0.0
        %376 = vmatprep.subr.mxu0 0.0
        %377 = vmatpush1.msra.mxu0 0.0
        %378 = vmatprep.subr.mxu0 0.0
        %379 = vmatpush1.msra.mxu0 0.0
        %380 = vmatprep.subr.mxu0 0.0
        %381 = vmatpush1.msra.mxu0 0.0
        %382 = vmatprep.subr.mxu0 0.0
        %383 = vmatpush1.msra.mxu0 0.0
        %384 = vmatprep.subr.mxu0 0.0
        %385 = vmatpush1.msra.mxu0 0.0
        %386 = vmatprep.subr.mxu0 0.0
        %387 = vmatpush1.msra.mxu0 0.0
        %388 = vmatprep.subr.mxu0 0.0
        %389 = vmatpush1.msra.mxu0 0.0
        %390 = vmatprep.subr.mxu0 0.0
        %391 = vmatpush1.msra.mxu0 0.0
        %392 = vmatprep.mubr.f32.mxu0 0.0
        %393 = vmatmul.mubr.f32.gmra.mrb[0].mxu0 %v326
        %v394 = vpop.f32.mrb[0].mxu0
        %v395 = vadd.f32 %v322, %v394
        %v396 = vpop.f32.mrb[0].mxu0
        %397 = vdwg.mxu0
        %v398 = vmax.f32 %v395, 0.0
        %v399 = vld [vmem:[#allocation7] sm:$0xff]
        %v400 = vld [vmem:[#allocation7 + $0x8] sm:$0xff]
        %v401 = vld [vmem:[#allocation7 + $0x10] sm:$0xff]
        %v402 = vld [vmem:[#allocation7 + $0x18] sm:$0xff]
        %v403 = vld [vmem:[%s4] sm:$0x1]
        %v405 = vlaneseq
        %v406 = vshrl.u32 %v405, 7
        %v407 = vsub.s32 0, %v406
        %v408 = vrot.slane %v403, %v407
        %v411 = vsel %vm324, %v398, 0
        %413 = vmatprep.subr.mxu0 0.0
        %414 = vmatpush1.msra.mxu0 %v399
        %415 = vmatprep.subr.mxu0 0.0
        %416 = vmatpush1.msra.mxu0 %v400
        %417 = vmatprep.subr.mxu0 0.0
        %418 = vmatpush1.msra.mxu0 %v401
        %419 = vmatprep.subr.mxu0 0.0
        %420 = vmatpush1.msra.mxu0 %v402
        %421 = vmatprep.subr.mxu0 0.0
        %422 = vmatpush1.msra.mxu0 0.0
        %423 = vmatprep.subr.mxu0 0.0
        %424 = vmatpush1.msra.mxu0 0.0
        %425 = vmatprep.subr.mxu0 0.0
        %426 = vmatpush1.msra.mxu0 0.0
        %427 = vmatprep.subr.mxu0 0.0
        %428 = vmatpush1.msra.mxu0 0.0
        %429 = vmatprep.subr.mxu0 0.0
        %430 = vmatpush1.msra.mxu0 0.0
        %431 = vmatprep.subr.mxu0 0.0
        %432 = vmatpush1.msra.mxu0 0.0
        %433 = vmatprep.subr.mxu0 0.0
        %434 = vmatpush1.msra.mxu0 0.0
        %435 = vmatprep.subr.mxu0 0.0
        %436 = vmatpush1.msra.mxu0 0.0
        %437 = vmatprep.subr.mxu0 0.0
        %438 = vmatpush1.msra.mxu0 0.0
        %439 = vmatprep.subr.mxu0 0.0
        %440 = vmatpush1.msra.mxu0 0.0
        %441 = vmatprep.subr.mxu0 0.0
        %442 = vmatpush1.msra.mxu0 0.0
        %443 = vmatprep.subr.mxu0 0.0
        %444 = vmatpush1.msra.mxu0 0.0
        %445 = vmatprep.subr.mxu0 0.0
        %446 = vmatpush1.msra.mxu0 0.0
        %447 = vmatprep.subr.mxu0 0.0
        %448 = vmatpush1.msra.mxu0 0.0
        %449 = vmatprep.subr.mxu0 0.0
        %450 = vmatpush1.msra.mxu0 0.0
        %451 = vmatprep.subr.mxu0 0.0
        %452 = vmatpush1.msra.mxu0 0.0
        %453 = vmatprep.subr.mxu0 0.0
        %454 = vmatpush1.msra.mxu0 0.0
        %455 = vmatprep.subr.mxu0 0.0
        %456 = vmatpush1.msra.mxu0 0.0
        %457 = vmatprep.subr.mxu0 0.0
        %458 = vmatpush1.msra.mxu0 0.0
        %459 = vmatprep.subr.mxu0 0.0
        %460 = vmatpush1.msra.mxu0 0.0
        %461 = vmatprep.subr.mxu0 0.0
        %462 = vmatpush1.msra.mxu0 0.0
        %463 = vmatprep.subr.mxu0 0.0
        %464 = vmatpush1.msra.mxu0 0.0
        %465 = vmatprep.subr.mxu0 0.0
        %466 = vmatpush1.msra.mxu0 0.0
        %467 = vmatprep.subr.mxu0 0.0
        %468 = vmatpush1.msra.mxu0 0.0
        %469 = vmatprep.subr.mxu0 0.0
        %470 = vmatpush1.msra.mxu0 0.0
        %471 = vmatprep.subr.mxu0 0.0
        %472 = vmatpush1.msra.mxu0 0.0
        %473 = vmatprep.subr.mxu0 0.0
        %474 = vmatpush1.msra.mxu0 0.0
        %475 = vmatprep.subr.mxu0 0.0
        %476 = vmatpush1.msra.mxu0 0.0
        %477 = vmatprep.mubr.f32.mxu0 0.0
        %478 = vmatmul.mubr.f32.gmra.mrb[0].mxu0 %v411
        %v479 = vpop.f32.mrb[0].mxu0
        %v480 = vadd.f32 %v408, %v479
        %v481 = vpop.f32.mrb[0].mxu0
        %482 = vdwg.mxu0
        %v483 = vld [vmem:[#allocation8] sm:$0xff]
        %v484 = vld [vmem:[#allocation8 + $0x8] sm:$0xff]
        %v485 = vld [vmem:[#allocation8 + $0x10] sm:$0xff]
        %v486 = vld [vmem:[#allocation8 + $0x18] sm:$0xff]
        %v488 = vsel %vm324, %v311, 0
        %490 = vmatprep.subr.mxu0 0.0
        %491 = vmatpush1.msra.mxu0 %v483
        %492 = vmatprep.subr.mxu0 0.0
        %493 = vmatpush1.msra.mxu0 %v484
        %494 = vmatprep.subr.mxu0 0.0
        %495 = vmatpush1.msra.mxu0 %v485
        %496 = vmatprep.subr.mxu0 0.0
        %497 = vmatpush1.msra.mxu0 %v486
        %498 = vmatprep.subr.mxu0 0.0
        %499 = vmatpush1.msra.mxu0 0.0
        %500 = vmatprep.subr.mxu0 0.0
        %501 = vmatpush1.msra.mxu0 0.0
        %502 = vmatprep.subr.mxu0 0.0
        %503 = vmatpush1.msra.mxu0 0.0
        %504 = vmatprep.subr.mxu0 0.0
        %505 = vmatpush1.msra.mxu0 0.0
        %506 = vmatprep.subr.mxu0 0.0
        %507 = vmatpush1.msra.mxu0 0.0
        %508 = vmatprep.subr.mxu0 0.0
        %509 = vmatpush1.msra.mxu0 0.0
        %510 = vmatprep.subr.mxu0 0.0
        %511 = vmatpush1.msra.mxu0 0.0
        %512 = vmatprep.subr.mxu0 0.0
        %513 = vmatpush1.msra.mxu0 0.0
        %514 = vmatprep.subr.mxu0 0.0
        %515 = vmatpush1.msra.mxu0 0.0
        %516 = vmatprep.subr.mxu0 0.0
        %517 = vmatpush1.msra.mxu0 0.0
        %518 = vmatprep.subr.mxu0 0.0
        %519 = vmatpush1.msra.mxu0 0.0
        %520 = vmatprep.subr.mxu0 0.0
        %521 = vmatpush1.msra.mxu0 0.0
        %522 = vmatprep.subr.mxu0 0.0
        %523 = vmatpush1.msra.mxu0 0.0
        %524 = vmatprep.subr.mxu0 0.0
        %525 = vmatpush1.msra.mxu0 0.0
        %526 = vmatprep.subr.mxu0 0.0
        %527 = vmatpush1.msra.mxu0 0.0
        %528 = vmatprep.subr.mxu0 0.0
        %529 = vmatpush1.msra.mxu0 0.0
        %530 = vmatprep.subr.mxu0 0.0
        %531 = vmatpush1.msra.mxu0 0.0
        %532 = vmatprep.subr.mxu0 0.0
        %533 = vmatpush1.msra.mxu0 0.0
        %534 = vmatprep.subr.mxu0 0.0
        %535 = vmatpush1.msra.mxu0 0.0
        %536 = vmatprep.subr.mxu0 0.0
        %537 = vmatpush1.msra.mxu0 0.0
        %538 = vmatprep.subr.mxu0 0.0
        %539 = vmatpush1.msra.mxu0 0.0
        %540 = vmatprep.subr.mxu0 0.0
        %541 = vmatpush1.msra.mxu0 0.0
        %542 = vmatprep.subr.mxu0 0.0
        %543 = vmatpush1.msra.mxu0 0.0
        %544 = vmatprep.subr.mxu0 0.0
        %545 = vmatpush1.msra.mxu0 0.0
        %546 = vmatprep.subr.mxu0 0.0
        %547 = vmatpush1.msra.mxu0 0.0
        %548 = vmatprep.subr.mxu0 0.0
        %549 = vmatpush1.msra.mxu0 0.0
        %550 = vmatprep.subr.mxu0 0.0
        %551 = vmatpush1.msra.mxu0 0.0
        %552 = vmatprep.subr.mxu0 0.0
        %553 = vmatpush1.msra.mxu0 0.0
        %554 = vmatprep.mubr.f32.mxu0 0.0
        %555 = vmatmul.mubr.f32.gmra.mrb[0].mxu0 %v488
        %v556 = vpop.f32.mrb[0].mxu0
        %v557 = vadd.f32 %v480, %v556
        %v558 = vpop.f32.mrb[0].mxu0
        %559 = vdwg.mxu0
        %vm560 = vcmask 392192
        %561 = vst.msk [vmem:[%s310] sm:$0xff] %vm560, %v557
        %s562 = sand.u32 %s164, 1
        %s563 = scalar_lea.sflag [#allocation4], %s562
        %s564 = sand.u32 %s164, 1
        %s565 = smul.addr %s564, 8
        %s566 = scalar_lea.vmem [#allocation10], %s565
        // Predicated region
        $region61: #{resnet_block_fc.1} parent=43 // pred_check
          %p567 = pneg %p174
        $region62: #{resnet_block_fc.1} parent=43 // pred_check_branch
          %569 = sbr.rel (%p567) target = $region64
        $region63: #{resnet_block_fc.1} parent=43 // pred_region
          %s571 = ssub.s32 128, 128
          %572 = vsyncadd %s563, %s571
          %s573 = smul.addr %s25, 128
          %s574 = scalar_lea.hbm %s6, %s573
          %s576 = sshll.u32 %s566, 4
          %s577 = int_to_ptr.vmem [resolvable:$true] %s576
          %579 = dma.vmem_to_hbm [thread:$0]  %s577, 128, %s574, %s563
        $region64: #{resnet_block_fc.1} parent=43 // pred_fallthru
          _
      $region44: #{resnet_block_fc.1} parent=5 // pred_fallthru
        _
      %p580 = scmp.le.s32.totalorder 2, %s20
      // Predicated region
      $region65: #{resnet_block_fc.1} parent=5 // pred_check
        %p581 = pneg %p580
      $region66: #{resnet_block_fc.1} parent=5 // pred_check_branch
        %583 = sbr.rel (%p581) target = $region68
      $region67: #{resnet_block_fc.1} parent=5 // pred_region
        %s584 = ssub.s32 %s20, 2
        // Predicated region
        $region69: #{resnet_block_fc.1} parent=67 // pred_check
          %p585 = pneg %p180
        $region70: #{resnet_block_fc.1} parent=67 // pred_check_branch
          %587 = sbr.rel (%p585) target = $region72
        $region71: #{resnet_block_fc.1} parent=67 // pred_region
          %s588 = sand.u32 %s165, 1
          %s589 = scalar_lea.sflag [#allocation4], %s588
          %s590 = sand.u32 %s165, 1
          %s591 = smul.addr %s590, 8
          %s592 = scalar_lea.vmem [#allocation10], %s591
          %593 = dma.done %s589, 128
        $region72: #{resnet_block_fc.1} parent=67 // pred_fallthru
          _
      $region68: #{resnet_block_fc.1} parent=5 // pred_fallthru
        _
    $region6: #{resnet_block_fc.1} parent=1 // loop_footer
      %s24 = sadd.s32 1, %s20
    $region7: #{resnet_block_fc.1} parent=1 // loop_footer_branch
      %19 = sbr.rel target = $region3
    $region8: #{resnet_block_fc.1} parent=1 // loop_exit
      _
    %594 = vsyncpa [#allocation3], 1
    %s595 = scalar_lea.sflag [#allocation3], 1
    %596 = vsyncpa %s595, 1
    %597 = vsyncpa [#allocation6], 1
    %598 = vsyncpa [#allocation9], 1
    %599 = vsyncpa [#allocation4], 1
    %s600 = scalar_lea.sflag [#allocation4], 1
    %601 = vsyncpa %s600, 1

</llo_original>
